<compile_context>
chip_gen: v5e
topology: v5e:2x2
jax: 0.10.0
libtpu: 0.0.40
codegen_flags: <defaults>
</compile_context>

<pallas_src>
import jax
import jax.numpy as jnp
from jax.experimental import pallas as pl
from jax.experimental.pallas import tpu as pltpu


def _make_fused_gat_kernel(has_res_flags, fouts):
    """Builds a kernel applying all GAT layers back-to-back in VMEM."""
    n_layers = len(has_res_flags)

    def kernel(adj_ref, h_ref, *refs):
        out_ref = refs[-1]
        prefs = refs[:-1]

        # Compact int8 adjacency -> f32 mask once, reused by every layer.
        mask = adj_ref[...].astype(jnp.float32) > 0.0        # (N, N)  A[dst, src]
        neg_inf = jnp.float32(-1e30)

        x = h_ref[...]                                        # (N, Fin0) f32
        idx = 0
        for li in range(n_layers):
            fout = fouts[li]
            w_ext = prefs[idx][...]; idx += 1                 # (Fin, Fout + 2)
            if has_res_flags[li]:
                w_res = prefs[idx][...]; idx += 1             # (Fin, Fout)
            bias = prefs[idx][...]; idx += 1                  # (1, Fout)

            # Single lane-dense projection producing z, el, er at once.
            z_ext = jnp.dot(x, w_ext, preferred_element_type=jnp.float32)
            z = z_ext[:, :fout]                               # (N, Fout)
            el = z_ext[:, fout:fout + 1]                      # (N, 1)  per-src
            er = z_ext[:, fout + 1:fout + 2]                  # (N, 1)  per-dst

            e = er + el.T                                     # e[dst, src]
            e = jnp.where(e > 0, e, 0.2 * e)                  # leaky_relu(0.2)

            # Masked softmax over incoming edges (per destination row).
            e_m = jnp.where(mask, e, neg_inf)
            m = jnp.max(e_m, axis=-1, keepdims=True)          # (N, 1)
            p = jnp.where(mask, jnp.exp(e_m - m), 0.0)        # (N, N)
            denom = jnp.sum(p, axis=-1, keepdims=True)        # (N, 1)
            denom = jnp.maximum(denom, jnp.float32(1e-20))    # zero in-degree guard
            alpha = p * pl.reciprocal(denom, approx=True)     # EUP recip + VPU mul

            # Aggregate, residual, bias, ELU.
            rst = jnp.dot(alpha, z, preferred_element_type=jnp.float32)
            if has_res_flags[li]:
                res = jnp.dot(x, w_res, preferred_element_type=jnp.float32)
            else:
                res = x                                       # identity residual
            y = rst + res + bias
            x = jnp.where(y > 0, y, jnp.exp(y) - 1.0)         # ELU

        out_ref[...] = x

    return kernel


def homo_embedding_fused(adj_i8, features, params):
    """One pallas_call applying every GATConv layer; small graph fully in VMEM."""
    n = features.shape[0]
    operands = [adj_i8, features]
    has_res_flags = []
    fouts = []
    for (w, w_res, attn_l, attn_r, b) in params:
        fin, fout = w.shape
        # Fold attention vectors into the projection: W_ext = [W | W@al | W@ar].
        w_att = jnp.concatenate(
            [w @ attn_l.reshape(fout, 1), w @ attn_r.reshape(fout, 1)], axis=1)
        w_ext = jnp.concatenate([w, w_att], axis=1)           # (fin, fout + 2)
        operands.append(w_ext)
        has_res = (fin != fout)                               # static (shape-based)
        if has_res:
            operands.append(w_res)
        operands.append(b.reshape(1, fout))
        has_res_flags.append(has_res)
        fouts.append(fout)

    kernel = _make_fused_gat_kernel(tuple(has_res_flags), tuple(fouts))
    vmem = pl.BlockSpec(memory_space=pltpu.MemorySpace.VMEM)
    return pl.pallas_call(
        kernel,
        out_shape=jax.ShapeDtypeStruct((n, fouts[-1]), jnp.float32),
        in_specs=[vmem] * len(operands),
        out_specs=vmem,
    )(*operands)


def init_params(key, in_feats, out_feats):
    """Deterministic synthetic parameters for each GATConv layer."""
    params = []
    for fin, fout in zip(in_feats, out_feats):
        key, k_w, k_wr, k_al, k_ar = jax.random.split(key, 5)
        w = jax.random.normal(k_w, (fin, fout), jnp.float32) * 0.1
        # Residual projection only exists when Fin != Fout (DGL uses Identity otherwise).
        w_res = (None if fin == fout
                 else jax.random.normal(k_wr, (fin, fout), jnp.float32) * 0.1)
        attn_l = jax.random.normal(k_al, (fout,), jnp.float32) * 0.1
        attn_r = jax.random.normal(k_ar, (fout,), jnp.float32) * 0.1
        b = jnp.zeros((fout,), jnp.float32)
        params.append((w, w_res, attn_l, attn_r, b))
    return params


@jax.jit
def homo_embedding_forward(adj_i8, features, params):
    """Stacked GATConv layers; mean over the single head is the identity."""
    return homo_embedding_fused(adj_i8, features, params)


if __name__ == "__main__":
    key = jax.random.PRNGKey(0)

    # Small synthetic homogeneous graph: N nodes, ring edges + self-loops.
    N = 16
    in_feats = [16, 32]
    out_feats = [32, 32]   # layer1 input must equal layer0 output

    src = jnp.arange(N)
    dst = jnp.roll(jnp.arange(N), -1)
    adj = jnp.zeros((N, N), jnp.int8)
    adj = adj.at[dst, src].set(1)                             # ring edges src -> dst
    adj = adj.at[jnp.arange(N), jnp.arange(N)].set(1)         # self-loops

    key, k_feat = jax.random.split(key)
    features = jax.random.normal(k_feat, (N, in_feats[0]), jnp.float32)

    params = tuple(init_params(key, in_feats, out_feats))

    out = homo_embedding_forward(adj, features, params)
    out = jax.block_until_ready(out)
    assert out.shape == (N, out_feats[-1])
    assert jnp.all(jnp.isfinite(out))
    print("KERNEL_OK")
</pallas_src>

<mosaic_0001>
module attributes {stable_mosaic.version = 11 : i64} {
  func.func @kernel(%arg0: memref<16x16xi8, #tpu.memory_space<vmem>>, %arg1: memref<16x16xf32, #tpu.memory_space<vmem>>, %arg2: memref<16x34xf32, #tpu.memory_space<vmem>>, %arg3: memref<16x32xf32, #tpu.memory_space<vmem>>, %arg4: memref<1x32xf32, #tpu.memory_space<vmem>>, %arg5: memref<32x34xf32, #tpu.memory_space<vmem>>, %arg6: memref<1x32xf32, #tpu.memory_space<vmem>>, %arg7: memref<16x32xf32, #tpu.memory_space<vmem>>) attributes {dimension_semantics = [], scalar_prefetch = 0 : i64, scratch_operands = 0 : i64, tpu.core_type = #tpu.core_type<tc>} {
    %c0 = arith.constant 0 : index
    %c0_0 = arith.constant 0 : index
    %0 = vector.load %arg0[%c0, %c0_0] : memref<16x16xi8, #tpu.memory_space<vmem>>, vector<16x16xi8>
    %1 = arith.sitofp %0 : vector<16x16xi8> to vector<16x16xf32>
    %cst = arith.constant 0.000000e+00 : f32
    %2 = vector.broadcast %cst : f32 to vector<16x16xf32>
    %3 = arith.cmpf ogt, %1, %2 : vector<16x16xf32>
    %c0_1 = arith.constant 0 : index
    %c0_2 = arith.constant 0 : index
    %4 = vector.load %arg1[%c0_1, %c0_2] : memref<16x16xf32, #tpu.memory_space<vmem>>, vector<16x16xf32>
    %c0_3 = arith.constant 0 : index
    %c0_4 = arith.constant 0 : index
    %5 = vector.load %arg2[%c0_3, %c0_4] : memref<16x34xf32, #tpu.memory_space<vmem>>, vector<16x34xf32>
    %c0_5 = arith.constant 0 : index
    %c0_6 = arith.constant 0 : index
    %6 = vector.load %arg3[%c0_5, %c0_6] : memref<16x32xf32, #tpu.memory_space<vmem>>, vector<16x32xf32>
    %c0_7 = arith.constant 0 : index
    %c0_8 = arith.constant 0 : index
    %7 = vector.load %arg4[%c0_7, %c0_8] : memref<1x32xf32, #tpu.memory_space<vmem>>, vector<1x32xf32>
    %cst_9 = arith.constant dense<0.000000e+00> : vector<16x34xf32>
    %8 = tpu.matmul %4, %5, %cst_9 {dimension_numbers = #tpu.dot_dimension_numbers<[1], [0], [0], [1], [0, 0, 1, 1], [], []>} : vector<16x16xf32>, vector<16x34xf32>, vector<16x34xf32> -> vector<16x34xf32>
    %9 = vector.extract_strided_slice %8 {offsets = [0, 0], sizes = [16, 32], strides = [1, 1]} : vector<16x34xf32> to vector<16x32xf32>
    %10 = vector.extract_strided_slice %8 {offsets = [0, 32], sizes = [16, 1], strides = [1, 1]} : vector<16x34xf32> to vector<16x1xf32>
    %11 = vector.extract_strided_slice %8 {offsets = [0, 33], sizes = [16, 1], strides = [1, 1]} : vector<16x34xf32> to vector<16x1xf32>
    %12 = tpu.transpose %10, [1, 0] : vector<16x1xf32> -> vector<1x16xf32>
    %13 = vector.broadcast %11 : vector<16x1xf32> to vector<16x16xf32>
    %14 = vector.broadcast %12 : vector<1x16xf32> to vector<16x16xf32>
    %15 = arith.addf %13, %14 : vector<16x16xf32>
    %cst_10 = arith.constant 0.000000e+00 : f32
    %16 = vector.broadcast %cst_10 : f32 to vector<16x16xf32>
    %17 = arith.cmpf ogt, %15, %16 : vector<16x16xf32>
    %cst_11 = arith.constant 2.000000e-01 : f32
    %18 = vector.broadcast %cst_11 : f32 to vector<16x16xf32>
    %19 = arith.mulf %18, %15 : vector<16x16xf32>
    %20 = arith.select %17, %15, %19 : vector<16x16xi1>, vector<16x16xf32>
    %cst_12 = arith.constant -1.000000e+30 : f32
    %21 = vector.broadcast %cst_12 : f32 to vector<16x16xf32>
    %22 = arith.select %3, %20, %21 : vector<16x16xi1>, vector<16x16xf32>
    %cst_13 = arith.constant dense<0xFF800000> : vector<16xf32>
    %23 = vector.multi_reduction <maximumf>, %22, %cst_13 [1] : vector<16x16xf32> to vector<16xf32>
    %24 = vector.shape_cast %23 : vector<16xf32> to vector<16x1xf32>
    %25 = vector.broadcast %24 : vector<16x1xf32> to vector<16x16xf32>
    %26 = arith.subf %22, %25 : vector<16x16xf32>
    %27 = math.exp %26 : vector<16x16xf32>
    %cst_14 = arith.constant 0.000000e+00 : f32
    %28 = vector.broadcast %cst_14 : f32 to vector<16x16xf32>
    %29 = arith.select %3, %27, %28 : vector<16x16xi1>, vector<16x16xf32>
    %cst_15 = arith.constant dense<0.000000e+00> : vector<16xf32>
    %30 = vector.multi_reduction <add>, %29, %cst_15 [1] : vector<16x16xf32> to vector<16xf32>
    %31 = vector.shape_cast %30 : vector<16xf32> to vector<16x1xf32>
    %cst_16 = arith.constant 9.99999968E-21 : f32
    %32 = vector.broadcast %cst_16 : f32 to vector<16x1xf32>
    %33 = arith.maximumf %31, %32 : vector<16x1xf32>
    %34 = tpu.reciprocal %33 {approx = true} : vector<16x1xf32> -> vector<16x1xf32>
    %35 = vector.broadcast %34 : vector<16x1xf32> to vector<16x16xf32>
    %36 = arith.mulf %29, %35 : vector<16x16xf32>
    %cst_17 = arith.constant dense<0.000000e+00> : vector<16x32xf32>
    %37 = tpu.matmul %36, %9, %cst_17 {dimension_numbers = #tpu.dot_dimension_numbers<[1], [0], [0], [1], [0, 0, 1, 1], [], []>} : vector<16x16xf32>, vector<16x32xf32>, vector<16x32xf32> -> vector<16x32xf32>
    %cst_18 = arith.constant dense<0.000000e+00> : vector<16x32xf32>
    %38 = tpu.matmul %4, %6, %cst_18 {dimension_numbers = #tpu.dot_dimension_numbers<[1], [0], [0], [1], [0, 0, 1, 1], [], []>} : vector<16x16xf32>, vector<16x32xf32>, vector<16x32xf32> -> vector<16x32xf32>
    %39 = arith.addf %37, %38 : vector<16x32xf32>
    %40 = vector.broadcast %7 : vector<1x32xf32> to vector<16x32xf32>
    %41 = arith.addf %39, %40 : vector<16x32xf32>
    %cst_19 = arith.constant 0.000000e+00 : f32
    %42 = vector.broadcast %cst_19 : f32 to vector<16x32xf32>
    %43 = arith.cmpf ogt, %41, %42 : vector<16x32xf32>
    %44 = math.exp %41 : vector<16x32xf32>
    %cst_20 = arith.constant 1.000000e+00 : f32
    %45 = vector.broadcast %cst_20 : f32 to vector<16x32xf32>
    %46 = arith.subf %44, %45 : vector<16x32xf32>
    %47 = arith.select %43, %41, %46 : vector<16x32xi1>, vector<16x32xf32>
    %c0_21 = arith.constant 0 : index
    %c0_22 = arith.constant 0 : index
    %48 = vector.load %arg5[%c0_21, %c0_22] : memref<32x34xf32, #tpu.memory_space<vmem>>, vector<32x34xf32>
    %c0_23 = arith.constant 0 : index
    %c0_24 = arith.constant 0 : index
    %49 = vector.load %arg6[%c0_23, %c0_24] : memref<1x32xf32, #tpu.memory_space<vmem>>, vector<1x32xf32>
    %cst_25 = arith.constant dense<0.000000e+00> : vector<16x34xf32>
    %50 = tpu.matmul %47, %48, %cst_25 {dimension_numbers = #tpu.dot_dimension_numbers<[1], [0], [0], [1], [0, 0, 1, 1], [], []>} : vector<16x32xf32>, vector<32x34xf32>, vector<16x34xf32> -> vector<16x34xf32>
    %51 = vector.extract_strided_slice %50 {offsets = [0, 0], sizes = [16, 32], strides = [1, 1]} : vector<16x34xf32> to vector<16x32xf32>
    %52 = vector.extract_strided_slice %50 {offsets = [0, 32], sizes = [16, 1], strides = [1, 1]} : vector<16x34xf32> to vector<16x1xf32>
    %53 = vector.extract_strided_slice %50 {offsets = [0, 33], sizes = [16, 1], strides = [1, 1]} : vector<16x34xf32> to vector<16x1xf32>
    %54 = tpu.transpose %52, [1, 0] : vector<16x1xf32> -> vector<1x16xf32>
    %55 = vector.broadcast %53 : vector<16x1xf32> to vector<16x16xf32>
    %56 = vector.broadcast %54 : vector<1x16xf32> to vector<16x16xf32>
    %57 = arith.addf %55, %56 : vector<16x16xf32>
    %cst_26 = arith.constant 0.000000e+00 : f32
    %58 = vector.broadcast %cst_26 : f32 to vector<16x16xf32>
    %59 = arith.cmpf ogt, %57, %58 : vector<16x16xf32>
    %cst_27 = arith.constant 2.000000e-01 : f32
    %60 = vector.broadcast %cst_27 : f32 to vector<16x16xf32>
    %61 = arith.mulf %60, %57 : vector<16x16xf32>
    %62 = arith.select %59, %57, %61 : vector<16x16xi1>, vector<16x16xf32>
    %cst_28 = arith.constant -1.000000e+30 : f32
    %63 = vector.broadcast %cst_28 : f32 to vector<16x16xf32>
    %64 = arith.select %3, %62, %63 : vector<16x16xi1>, vector<16x16xf32>
    %cst_29 = arith.constant dense<0xFF800000> : vector<16xf32>
    %65 = vector.multi_reduction <maximumf>, %64, %cst_29 [1] : vector<16x16xf32> to vector<16xf32>
    %66 = vector.shape_cast %65 : vector<16xf32> to vector<16x1xf32>
    %67 = vector.broadcast %66 : vector<16x1xf32> to vector<16x16xf32>
    %68 = arith.subf %64, %67 : vector<16x16xf32>
    %69 = math.exp %68 : vector<16x16xf32>
    %cst_30 = arith.constant 0.000000e+00 : f32
    %70 = vector.broadcast %cst_30 : f32 to vector<16x16xf32>
    %71 = arith.select %3, %69, %70 : vector<16x16xi1>, vector<16x16xf32>
    %cst_31 = arith.constant dense<0.000000e+00> : vector<16xf32>
    %72 = vector.multi_reduction <add>, %71, %cst_31 [1] : vector<16x16xf32> to vector<16xf32>
    %73 = vector.shape_cast %72 : vector<16xf32> to vector<16x1xf32>
    %cst_32 = arith.constant 9.99999968E-21 : f32
    %74 = vector.broadcast %cst_32 : f32 to vector<16x1xf32>
    %75 = arith.maximumf %73, %74 : vector<16x1xf32>
    %76 = tpu.reciprocal %75 {approx = true} : vector<16x1xf32> -> vector<16x1xf32>
    %77 = vector.broadcast %76 : vector<16x1xf32> to vector<16x16xf32>
    %78 = arith.mulf %71, %77 : vector<16x16xf32>
    %cst_33 = arith.constant dense<0.000000e+00> : vector<16x32xf32>
    %79 = tpu.matmul %78, %51, %cst_33 {dimension_numbers = #tpu.dot_dimension_numbers<[1], [0], [0], [1], [0, 0, 1, 1], [], []>} : vector<16x16xf32>, vector<16x32xf32>, vector<16x32xf32> -> vector<16x32xf32>
    %80 = arith.addf %79, %47 : vector<16x32xf32>
    %81 = vector.broadcast %49 : vector<1x32xf32> to vector<16x32xf32>
    %82 = arith.addf %80, %81 : vector<16x32xf32>
    %cst_34 = arith.constant 0.000000e+00 : f32
    %83 = vector.broadcast %cst_34 : f32 to vector<16x32xf32>
    %84 = arith.cmpf ogt, %82, %83 : vector<16x32xf32>
    %85 = math.exp %82 : vector<16x32xf32>
    %cst_35 = arith.constant 1.000000e+00 : f32
    %86 = vector.broadcast %cst_35 : f32 to vector<16x32xf32>
    %87 = arith.subf %85, %86 : vector<16x32xf32>
    %88 = arith.select %84, %82, %87 : vector<16x32xi1>, vector<16x32xf32>
    %c0_36 = arith.constant 0 : index
    %c0_37 = arith.constant 0 : index
    %89 = vector.load %arg7[%c0_36, %c0_37] : memref<16x32xf32, #tpu.memory_space<vmem>>, vector<16x32xf32>
    tpu.vector_store %arg7[%c0_36, %c0_37], %88 {strides = array<i32>} : memref<16x32xf32, #tpu.memory_space<vmem>>, vector<16x32xf32>,
    return
  }
}

</mosaic_0001>

<llo_original>
// kernel: homo_embedding_forward.1
$region0: #{homo_embedding_forward.1}
  #allocation0 [shape = 'u32[]', space=smem, size = 0x4, offset = 0x4, fixed_abs, tag = 'smem constant byte address 0x4 - core index']
  #allocation1 [shape = 'u32[72,128]{1,0:T(1,128)}', space=vmem, size = 0x9000, scoped, tag = 'internal scratch']
  %s0 = inlined_call_operand.vmem [shape: s8[16,16], index: 0, kind: input, shape index: {}]
  %s1 = inlined_call_operand.vmem [shape: f32[16,16], index: 1, kind: input, shape index: {}]
  %s2 = inlined_call_operand.vmem [shape: f32[16,34], index: 2, kind: input, shape index: {}]
  %s3 = inlined_call_operand.vmem [shape: f32[16,32], index: 3, kind: input, shape index: {}]
  %s4 = inlined_call_operand.vmem [shape: f32[1,32], index: 4, kind: input, shape index: {}]
  %s5 = inlined_call_operand.vmem [shape: f32[32,34], index: 5, kind: input, shape index: {}]
  %s6 = inlined_call_operand.vmem [shape: f32[1,32], index: 6, kind: input, shape index: {}]
  %s7 = inlined_call_operand.hbm [shape: f32[16,32], index: 7, kind: output, shape index: {}]
  %s8 = sld [smem:[#allocation0]]
  $region38: #{homo_embedding_forward.1} parent=0
    _
  %s10 = ssub.s32 1, %s8
  %s11 = scalar_select 0, %s10, %s8
  $region1: #{homo_embedding_forward.1} parent=0
    #allocation2 [shape = 'u8[8192]{0}', space=vmem, size = 0x2000, scoped, tag = 'output window, operand 0, single buffered']
    #allocation3 [shape = 's32[1]{0}', space=sflag, size = 0x4, scoped, tag = 'scoped memory for homo_embedding_forward.1']
    %12 = vsyncpa [#allocation3], 0
    // Predicated region
    $region2: #{homo_embedding_forward.1} parent=1 // pred_check
      _
    $region3: #{homo_embedding_forward.1} parent=1 // pred_check_branch
      %14 = sbr.rel (0) target = $region5
    $region4: #{homo_embedding_forward.1} parent=1 // pred_region
      _
    $region5: #{homo_embedding_forward.1} parent=1 // pred_fallthru
      _
    // Predicated region
    $region6: #{homo_embedding_forward.1} parent=1 // pred_check
      _
    $region7: #{homo_embedding_forward.1} parent=1 // pred_check_branch
      %16 = sbr.rel (0) target = $region9
    $region8: #{homo_embedding_forward.1} parent=1 // pred_region
      _
    $region9: #{homo_embedding_forward.1} parent=1 // pred_fallthru
      _
    // Predicated region
    $region10: #{homo_embedding_forward.1} parent=1 // pred_check
      _
    $region11: #{homo_embedding_forward.1} parent=1 // pred_check_branch
      %18 = sbr.rel (0) target = $region13
    $region12: #{homo_embedding_forward.1} parent=1 // pred_region
      _
    $region13: #{homo_embedding_forward.1} parent=1 // pred_fallthru
      _
    // Predicated region
    $region14: #{homo_embedding_forward.1} parent=1 // pred_check
      _
    $region15: #{homo_embedding_forward.1} parent=1 // pred_check_branch
      %20 = sbr.rel (0) target = $region17
    $region16: #{homo_embedding_forward.1} parent=1 // pred_region
      _
    $region17: #{homo_embedding_forward.1} parent=1 // pred_fallthru
      _
    // Predicated region
    $region18: #{homo_embedding_forward.1} parent=1 // pred_check
      _
    $region19: #{homo_embedding_forward.1} parent=1 // pred_check_branch
      %22 = sbr.rel (0) target = $region21
    $region20: #{homo_embedding_forward.1} parent=1 // pred_region
      _
    $region21: #{homo_embedding_forward.1} parent=1 // pred_fallthru
      _
    // Predicated region
    $region22: #{homo_embedding_forward.1} parent=1 // pred_check
      _
    $region23: #{homo_embedding_forward.1} parent=1 // pred_check_branch
      %24 = sbr.rel (0) target = $region25
    $region24: #{homo_embedding_forward.1} parent=1 // pred_region
      _
    $region25: #{homo_embedding_forward.1} parent=1 // pred_fallthru
      _
    // Predicated region
    $region26: #{homo_embedding_forward.1} parent=1 // pred_check
      _
    $region27: #{homo_embedding_forward.1} parent=1 // pred_check_branch
      %26 = sbr.rel (0) target = $region29
    $region28: #{homo_embedding_forward.1} parent=1 // pred_region
      _
    $region29: #{homo_embedding_forward.1} parent=1 // pred_fallthru
      _
    %v27 = vld [vmem:[%s0] sm:$0x3]
    %v28 = vld [vmem:[%s0 + $0x2] sm:$0x3]
    %v29 = vunpack.c.0.s8 %v27
    %v30 = vunpack.c.0.s8 %v28
    %v31 = vcvt.s32.f32 %v29
    %v32 = vcvt.s32.f32 %v30
    %vm33 = vcmp.gt.f32.partialorder %v31, 0.0
    %vm34 = vcmp.gt.f32.partialorder %v32, 0.0
    %v35 = vld [vmem:[%s1] sm:$0xff]
    %v36 = vld [vmem:[%s1 + $0x8] sm:$0xff]
    %v37 = vld [vmem:[%s2] sm:$0xff]
    %v38 = vld [vmem:[%s2 + $0x8] sm:$0xff]
    %v39 = vld [vmem:[%s3] sm:$0xff]
    %v40 = vld [vmem:[%s3 + $0x8] sm:$0xff]
    %v41 = vld [vmem:[%s4] sm:$0x1]
    %vm42 = vcmask 130048
    %v44 = vsel %vm42, %v35, 0
    %v47 = vsel %vm42, %v36, 0
    %49 = vmatpush.msra.mxu0 0.0
    %50 = vmatpush.msra.mxu0 0.0
    %51 = vmatpush.msra.mxu0 0.0
    %52 = vmatpush.msra.mxu0 0.0
    %53 = vmatpush.msra.mxu0 0.0
    %54 = vmatpush.msra.mxu0 0.0
    %55 = vmatpush.msra.mxu0 0.0
    %56 = vmatpush.msra.mxu0 0.0
    %57 = vmatpush.msra.mxu0 0.0
    %58 = vmatpush.msra.mxu0 0.0
    %59 = vmatpush.msra.mxu0 0.0
    %60 = vmatpush.msra.mxu0 0.0
    %61 = vmatpush.msra.mxu0 0.0
    %62 = vmatpush.msra.mxu0 0.0
    %63 = vmatpush.msra.mxu0 %v38
    %64 = vmatpush.msra.mxu0 %v37
    %65 = vmatmul.f32.gmra.mxu0 %v44
    %v66 = vpop.f32.mrf.mxu0
    %v67 = vadd.f32 0.0, %v66
    %68 = vmatmul.f32.gmra.mxu0 %v47
    %v69 = vpop.f32.mrf.mxu0
    %v70 = vadd.f32 0.0, %v69
    %71 = vdwg.mxu0
    %74 = vrot.lane.b32.xlu0 %v67, 96
    %v75 = vpop.permute.xlu0 %74
    %76 = vrot.lane.b32.xlu0 %v70, 96
    %v77 = vpop.permute.xlu0 %76
    %80 = vxpose.xlu0.b32.start [1/16] %v75, 128
    %81 = vxpose.xlu0.b32.cont [2/16] %v77, 128
    %82 = vxpose.xlu0.b32.cont [3/16] 0.0, 128
    %83 = vxpose.xlu0.b32.cont [4/16] 0.0, 128
    %84 = vxpose.xlu0.b32.cont [5/16] 0.0, 128
    %85 = vxpose.xlu0.b32.cont [6/16] 0.0, 128
    %86 = vxpose.xlu0.b32.cont [7/16] 0.0, 128
    %87 = vxpose.xlu0.b32.cont [8/16] 0.0, 128
    %88 = vxpose.xlu0.b32.cont [9/16] 0.0, 128
    %89 = vxpose.xlu0.b32.cont [10/16] 0.0, 128
    %90 = vxpose.xlu0.b32.cont [11/16] 0.0, 128
    %91 = vxpose.xlu0.b32.cont [12/16] 0.0, 128
    %92 = vxpose.xlu0.b32.cont [13/16] 0.0, 128
    %93 = vxpose.xlu0.b32.cont [14/16] 0.0, 128
    %94 = vxpose.xlu0.b32.cont [15/16] 0.0, 128
    %95 = vxpose.xlu0.b32.end [16/16] 0.0, 128
    %v96 = vpop.trf.xlu0
    %v97 = vpop.trf.xlu0
    %v98 = vpop.trf.xlu0
    %v99 = vpop.trf.xlu0
    %v100 = vpop.trf.xlu0
    %v101 = vpop.trf.xlu0
    %v102 = vpop.trf.xlu0
    %v103 = vpop.trf.xlu0
    %v104 = vpop.trf.xlu0
    %v105 = vpop.trf.xlu0
    %v106 = vpop.trf.xlu0
    %v107 = vpop.trf.xlu0
    %v108 = vpop.trf.xlu0
    %v109 = vpop.trf.xlu0
    %v110 = vpop.trf.xlu0
    %v111 = vpop.trf.xlu0
    %112 = vset.pattern.permute.xlu0 33
    %113 = vperm.xlu0 %112, %v67
    %v114 = vpop.permute.xlu0 %113
    %116 = vset.pattern.permute.xlu0 33
    %117 = vperm.xlu0 %116, %v70
    %v118 = vpop.permute.xlu0 %117
    %v120 = vperm.slane %v96, 0
    %v121 = vadd.f32 %v114, %v120
    %v122 = vadd.f32 %v118, %v120
    %vm123 = vcmp.gt.f32.partialorder %v121, 0.0
    %vm124 = vcmp.gt.f32.partialorder %v122, 0.0
    %v125 = vmul.f32 %v121, 0.2
    %v126 = vmul.f32 %v122, 0.2
    %v127 = vsel %vm123, %v121, %v125
    %v128 = vsel %vm124, %v122, %v126
    %v129 = vsel %vm33, %v127, -1e+30
    %v130 = vsel %vm34, %v128, -1e+30
    %v131 = vsel %vm42, %v129, -inf
    %132 = vmax.xlane.f32.xlu0 %v131
    %v133 = vpop.xlane.xlu0 %132
    %v134 = vsel %vm42, %v130, -inf
    %135 = vmax.xlane.f32.xlu0 %v134
    %v136 = vpop.xlane.xlu0 %135
    %v137 = vsub.f32 %v129, %v133
    %v138 = vsub.f32 %v130, %v136
    %v139 = vmul.f32 %v137, 1.442695
    %v140 = vpow.pop %v139
    %v141 = vmul.f32 %v138, 1.442695
    %v142 = vpow.pop %v141
    %v143 = vsel %vm33, %v140, 0.0
    %v144 = vsel %vm34, %v142, 0.0
    %v145 = vsel %vm42, %v143, 0.0
    %146 = vadd.xlane.f32.xlu0 %v145
    %v147 = vpop.xlane.xlu0 %146
    %v148 = vsel %vm42, %v144, 0.0
    %149 = vadd.xlane.f32.xlu0 %v148
    %v150 = vpop.xlane.xlu0 %149
    %v151 = vmax.f32 %v147, 1e-20
    %v152 = vmax.f32 %v150, 1e-20
    %v153 = vrcp.pop %v151
    %v154 = vrcp.pop %v152
    %v155 = vmul.f32 %v143, %v153
    %v156 = vmul.f32 %v144, %v154
    %157 = vmatpush.msra.mxu0 0.0
    %158 = vmatpush.msra.mxu0 0.0
    %159 = vmatpush.msra.mxu0 0.0
    %160 = vmatpush.msra.mxu0 0.0
    %161 = vmatpush.msra.mxu0 0.0
    %162 = vmatpush.msra.mxu0 0.0
    %163 = vmatpush.msra.mxu0 0.0
    %164 = vmatpush.msra.mxu0 0.0
    %165 = vmatpush.msra.mxu0 0.0
    %166 = vmatpush.msra.mxu0 0.0
    %167 = vmatpush.msra.mxu0 0.0
    %168 = vmatpush.msra.mxu0 0.0
    %169 = vmatpush.msra.mxu0 0.0
    %170 = vmatpush.msra.mxu0 0.0
    %171 = vmatpush.msra.mxu0 %v40
    %172 = vmatpush.msra.mxu0 %v39
    %173 = vmatmul.f32.gmra.mxu0 %v44
    %v174 = vpop.f32.mrf.mxu0
    %v175 = vadd.f32 0.0, %v174
    %176 = vmatmul.f32.gmra.mxu0 %v47
    %v177 = vpop.f32.mrf.mxu0
    %v178 = vadd.f32 0.0, %v177
    %179 = vdwg.mxu0
    %v181 = vsel %vm42, %v155, 0
    %v184 = vsel %vm42, %v156, 0
    %186 = vmatpush.msra.mxu0 0.0
    %187 = vmatpush.msra.mxu0 0.0
    %188 = vmatpush.msra.mxu0 0.0
    %189 = vmatpush.msra.mxu0 0.0
    %190 = vmatpush.msra.mxu0 0.0
    %191 = vmatpush.msra.mxu0 0.0
    %192 = vmatpush.msra.mxu0 0.0
    %193 = vmatpush.msra.mxu0 0.0
    %194 = vmatpush.msra.mxu0 0.0
    %195 = vmatpush.msra.mxu0 0.0
    %196 = vmatpush.msra.mxu0 0.0
    %197 = vmatpush.msra.mxu0 0.0
    %198 = vmatpush.msra.mxu0 0.0
    %199 = vmatpush.msra.mxu0 0.0
    %200 = vmatpush.msra.mxu0 %v70
    %201 = vmatpush.msra.mxu0 %v67
    %202 = vmatmul.f32.gmra.mxu0 %v181
    %v203 = vpop.f32.mrf.mxu0
    %v204 = vadd.f32 %v175, %v203
    %205 = vmatmul.f32.gmra.mxu0 %v184
    %v206 = vpop.f32.mrf.mxu0
    %v207 = vadd.f32 %v178, %v206
    %208 = vdwg.mxu0
    %v210 = vperm.slane %v41, 0
    %v212 = vadd.f32 %v204, %v210
    %v213 = vadd.f32 %v207, %v210
    %vm214 = vcmp.gt.f32.partialorder %v212, 0.0
    %vm215 = vcmp.gt.f32.partialorder %v213, 0.0
    %v216 = vmul.f32 %v212, 1.442695
    %v217 = vpow.pop %v216
    %v218 = vmul.f32 %v213, 1.442695
    %v219 = vpow.pop %v218
    %v220 = vsub.f32 %v217, 1.0
    %v221 = vsub.f32 %v219, 1.0
    %v222 = vsel %vm214, %v212, %v220
    %v223 = vsel %vm215, %v213, %v221
    %v224 = vld [vmem:[%s5] sm:$0xff]
    %v225 = vld [vmem:[%s5 + $0x8] sm:$0xff]
    %v226 = vld [vmem:[%s5 + $0x10] sm:$0xff]
    %v227 = vld [vmem:[%s5 + $0x18] sm:$0xff]
    %v228 = vld [vmem:[%s6] sm:$0x1]
    %vm229 = vcmask 261120
    %v231 = vsel %vm229, %v222, 0
    %v234 = vsel %vm229, %v223, 0
    %236 = vmatpush.msra.mxu0 0.0
    %237 = vmatpush.msra.mxu0 0.0
    %238 = vmatpush.msra.mxu0 0.0
    %239 = vmatpush.msra.mxu0 0.0
    %240 = vmatpush.msra.mxu0 0.0
    %241 = vmatpush.msra.mxu0 0.0
    %242 = vmatpush.msra.mxu0 0.0
    %243 = vmatpush.msra.mxu0 0.0
    %244 = vmatpush.msra.mxu0 0.0
    %245 = vmatpush.msra.mxu0 0.0
    %246 = vmatpush.msra.mxu0 0.0
    %247 = vmatpush.msra.mxu0 0.0
    %248 = vmatpush.msra.mxu0 %v227
    %249 = vmatpush.msra.mxu0 %v226
    %250 = vmatpush.msra.mxu0 %v225
    %251 = vmatpush.msra.mxu0 %v224
    %252 = vmatmul.f32.gmra.mxu0 %v231
    %v253 = vpop.f32.mrf.mxu0
    %v254 = vadd.f32 0.0, %v253
    %255 = vmatmul.f32.gmra.mxu0 %v234
    %v256 = vpop.f32.mrf.mxu0
    %v257 = vadd.f32 0.0, %v256
    %258 = vdwg.mxu0
    %261 = vrot.lane.b32.xlu0 %v254, 96
    %v262 = vpop.permute.xlu0 %261
    %263 = vrot.lane.b32.xlu0 %v257, 96
    %v264 = vpop.permute.xlu0 %263
    %267 = vxpose.xlu0.b32.start [1/16] %v262, 128
    %268 = vxpose.xlu0.b32.cont [2/16] %v264, 128
    %269 = vxpose.xlu0.b32.cont [3/16] 0.0, 128
    %270 = vxpose.xlu0.b32.cont [4/16] 0.0, 128
    %271 = vxpose.xlu0.b32.cont [5/16] 0.0, 128
    %272 = vxpose.xlu0.b32.cont [6/16] 0.0, 128
    %273 = vxpose.xlu0.b32.cont [7/16] 0.0, 128
    %274 = vxpose.xlu0.b32.cont [8/16] 0.0, 128
    %275 = vxpose.xlu0.b32.cont [9/16] 0.0, 128
    %276 = vxpose.xlu0.b32.cont [10/16] 0.0, 128
    %277 = vxpose.xlu0.b32.cont [11/16] 0.0, 128
    %278 = vxpose.xlu0.b32.cont [12/16] 0.0, 128
    %279 = vxpose.xlu0.b32.cont [13/16] 0.0, 128
    %280 = vxpose.xlu0.b32.cont [14/16] 0.0, 128
    %281 = vxpose.xlu0.b32.cont [15/16] 0.0, 128
    %282 = vxpose.xlu0.b32.end [16/16] 0.0, 128
    %v283 = vpop.trf.xlu0
    %v284 = vpop.trf.xlu0
    %v285 = vpop.trf.xlu0
    %v286 = vpop.trf.xlu0
    %v287 = vpop.trf.xlu0
    %v288 = vpop.trf.xlu0
    %v289 = vpop.trf.xlu0
    %v290 = vpop.trf.xlu0
    %v291 = vpop.trf.xlu0
    %v292 = vpop.trf.xlu0
    %v293 = vpop.trf.xlu0
    %v294 = vpop.trf.xlu0
    %v295 = vpop.trf.xlu0
    %v296 = vpop.trf.xlu0
    %v297 = vpop.trf.xlu0
    %v298 = vpop.trf.xlu0
    %299 = vset.pattern.permute.xlu0 33
    %300 = vperm.xlu0 %299, %v254
    %v301 = vpop.permute.xlu0 %300
    %303 = vset.pattern.permute.xlu0 33
    %304 = vperm.xlu0 %303, %v257
    %v305 = vpop.permute.xlu0 %304
    %v307 = vperm.slane %v283, 0
    %v308 = vadd.f32 %v301, %v307
    %v309 = vadd.f32 %v305, %v307
    %vm310 = vcmp.gt.f32.partialorder %v308, 0.0
    %vm311 = vcmp.gt.f32.partialorder %v309, 0.0
    %v312 = vmul.f32 %v308, 0.2
    %v313 = vmul.f32 %v309, 0.2
    %v314 = vsel %vm310, %v308, %v312
    %v315 = vsel %vm311, %v309, %v313
    %v316 = vsel %vm33, %v314, -1e+30
    %v317 = vsel %vm34, %v315, -1e+30
    %v318 = vsel %vm42, %v316, -inf
    %319 = vmax.xlane.f32.xlu0 %v318
    %v320 = vpop.xlane.xlu0 %319
    %v321 = vsel %vm42, %v317, -inf
    %322 = vmax.xlane.f32.xlu0 %v321
    %v323 = vpop.xlane.xlu0 %322
    %v324 = vsub.f32 %v316, %v320
    %v325 = vsub.f32 %v317, %v323
    %v326 = vmul.f32 %v324, 1.442695
    %v327 = vpow.pop %v326
    %v328 = vmul.f32 %v325, 1.442695
    %v329 = vpow.pop %v328
    %v330 = vsel %vm33, %v327, 0.0
    %v331 = vsel %vm34, %v329, 0.0
    %v332 = vsel %vm42, %v330, 0.0
    %333 = vadd.xlane.f32.xlu0 %v332
    %v334 = vpop.xlane.xlu0 %333
    %v335 = vsel %vm42, %v331, 0.0
    %336 = vadd.xlane.f32.xlu0 %v335
    %v337 = vpop.xlane.xlu0 %336
    %v338 = vmax.f32 %v334, 1e-20
    %v339 = vmax.f32 %v337, 1e-20
    %v340 = vrcp.pop %v338
    %v341 = vrcp.pop %v339
    %v342 = vmul.f32 %v330, %v340
    %v343 = vmul.f32 %v331, %v341
    %v345 = vsel %vm42, %v342, 0
    %v348 = vsel %vm42, %v343, 0
    %350 = vmatpush.msra.mxu0 0.0
    %351 = vmatpush.msra.mxu0 0.0
    %352 = vmatpush.msra.mxu0 0.0
    %353 = vmatpush.msra.mxu0 0.0
    %354 = vmatpush.msra.mxu0 0.0
    %355 = vmatpush.msra.mxu0 0.0
    %356 = vmatpush.msra.mxu0 0.0
    %357 = vmatpush.msra.mxu0 0.0
    %358 = vmatpush.msra.mxu0 0.0
    %359 = vmatpush.msra.mxu0 0.0
    %360 = vmatpush.msra.mxu0 0.0
    %361 = vmatpush.msra.mxu0 0.0
    %362 = vmatpush.msra.mxu0 0.0
    %363 = vmatpush.msra.mxu0 0.0
    %364 = vmatpush.msra.mxu0 %v257
    %365 = vmatpush.msra.mxu0 %v254
    %366 = vmatmul.f32.gmra.mxu0 %v345
    %v367 = vpop.f32.mrf.mxu0
    %v368 = vadd.f32 %v222, %v367
    %369 = vmatmul.f32.gmra.mxu0 %v348
    %v370 = vpop.f32.mrf.mxu0
    %v371 = vadd.f32 %v223, %v370
    %372 = vdwg.mxu0
    %v374 = vperm.slane %v228, 0
    %v376 = vadd.f32 %v368, %v374
    %v377 = vadd.f32 %v371, %v374
    %vm378 = vcmp.gt.f32.partialorder %v376, 0.0
    %vm379 = vcmp.gt.f32.partialorder %v377, 0.0
    %v380 = vmul.f32 %v376, 1.442695
    %v381 = vpow.pop %v380
    %v382 = vmul.f32 %v377, 1.442695
    %v383 = vpow.pop %v382
    %v384 = vsub.f32 %v381, 1.0
    %v385 = vsub.f32 %v383, 1.0
    %v386 = vsel %vm378, %v376, %v384
    %v387 = vsel %vm379, %v377, %v385
    %388 = vst.msk [vmem:[#allocation2] sm:$0xff] %vm229, %v386
    %389 = vst.msk [vmem:[#allocation2 + $0x8] sm:$0xff] %vm229, %v387
    // Predicated region
    $region30: #{homo_embedding_forward.1} parent=1 // pred_check
      _
    $region31: #{homo_embedding_forward.1} parent=1 // pred_check_branch
      %391 = sbr.rel (0) target = $region33
    $region32: #{homo_embedding_forward.1} parent=1 // pred_region
      %393 = vsyncadd [#allocation3], 0
      %s394 = sshll.u32 [#allocation2], 4
      %s395 = int_to_ptr.vmem [resolvable:$true] %s394
      %s396 = sshll.u32 %s7, 4
      %s397 = int_to_ptr.hbm [resolvable:$true] %s396
      %402 = dma.vmem_to_hbm [thread:$0]  %s395, 256, %s397, [#allocation3], 128, 128, 8
    $region33: #{homo_embedding_forward.1} parent=1 // pred_fallthru
      _
    // Predicated region
    $region34: #{homo_embedding_forward.1} parent=1 // pred_check
      _
    $region35: #{homo_embedding_forward.1} parent=1 // pred_check_branch
      %404 = sbr.rel (0) target = $region37
    $region36: #{homo_embedding_forward.1} parent=1 // pred_region
      %406 = dma.done [#allocation3], 256
    $region37: #{homo_embedding_forward.1} parent=1 // pred_fallthru
      _
    %407 = vsyncpa [#allocation3], 1

</llo_original>
